<compile_context>
chip_gen: v7x
topology: tpu7x:2x2x1
jax: 0.10.0
libtpu: 0.0.40
codegen_flags: <defaults>
</compile_context>

<pallas_src>
import functools
import math

import jax
import jax.numpy as jnp
from jax.experimental import pallas as pl
from jax.experimental.pallas import tpu as pltpu


def spatial_attention_kernel(
    x_ref,        # (bb, N, H)   activation block
    wqkv_ref,     # (H, 3*blk)   fused [Wq.T*scale | 0 | Wk.T | 0 | Wv.T | 0]
    wo_ref,       # (H, H)       Wo.T
    bias_ref,     # (8, H)       rows: bq*scale, bk, bv, bo, gamma, beta, 0, 0
    sel_ref,      # (num_heads*N, H)  0/1 head selector (block-diag mask)
    abias_ref,    # (N, num_heads*N)  additive edge-mask bias (per head)
    out_ref,      # (bb, N, H)
    *, num_heads: int,
):
    bb, N, H = x_ref.shape
    blk = wqkv_ref.shape[1] // 3   # lane-tile-aligned width of each Q/K/V block

    # ---- fused QKV projection over all bb*N rows: one wide MXU matmul ----
    # (leading-dim merge only -> layout no-op)
    x2 = x_ref[...].reshape(bb * N, H)
    qkv = jnp.dot(x2, wqkv_ref[...], preferred_element_type=jnp.float32)  # (bb*N, 3*blk)
    # Each slice below starts on a 128-lane tile boundary -> no lane relayout.
    q = qkv[:, 0:H] + bias_ref[0:1, :]                    # scale already folded in
    k = qkv[:, blk:blk + H] + bias_ref[1:2, :]
    v = qkv[:, 2 * blk:2 * blk + H] + bias_ref[2:3, :]

    sel = sel_ref[...]        # (hN, H)
    abias = abias_ref[...]    # (N, hN)

    att_rows = []
    for b in range(bb):       # bb <= 8 by construction (wrapper caps it)
        lo = b * N
        q_b = q[lo:lo + N, :]
        k_b = k[lo:lo + N, :]
        v_b = v[lo:lo + N, :]

        # Block-diagonal expansion of K / V along the (num_heads*N) axis:
        #   k_bd[h*N + m, j] = k_b[m, j] if column j belongs to head h else 0
        k_bd = jnp.concatenate([k_b] * num_heads, axis=0) * sel     # (hN, H)
        v_bd = jnp.concatenate([v_b] * num_heads, axis=0) * sel     # (hN, H)

        # All heads' scores in ONE lane-dense matmul: s[n, h*N+m] = q_h[n]·k_h[m]
        s = jax.lax.dot_general(
            q_b, k_bd, (((1,), (1,)), ((), ())),
            preferred_element_type=jnp.float32) + abias             # (N, hN)

        # Per-head softmax with deferred normalisation.  Subtracting the GLOBAL
        # row max is identical per head (the shift cancels in softmax).
        m = jnp.max(s, axis=-1, keepdims=True)
        e = jnp.exp(s - m)
        # Un-normalised attended values and per-head denominators; within each
        # output column only one head's rows contribute, so dividing afterwards
        # is mathematically identical to normalising e first.
        att_un = jnp.dot(e, v_bd, preferred_element_type=jnp.float32)  # (N, H)
        denom = jnp.dot(e, sel, preferred_element_type=jnp.float32)    # (N, H)
        denom = jnp.maximum(denom, 1e-30)   # guard exp-underflow / isolated heads
        att_rows.append(att_un * pl.reciprocal(denom, approx=False))
        # TODO(synk): nn.Dropout(0.1) on attention weights is identity in eval
        # mode; training-mode stochastic dropout is not reproduced here.

    att_all = jnp.concatenate(att_rows, axis=0) if bb > 1 else att_rows[0]  # (bb*N, H)

    # ---- output projection + residual + LayerNorm, once over all bb*N rows ----
    o = jnp.dot(att_all, wo_ref[...], preferred_element_type=jnp.float32)
    y = x2 + o + bias_ref[3:4, :]
    mu = jnp.mean(y, axis=-1, keepdims=True)
    var = jnp.mean((y - mu) * (y - mu), axis=-1, keepdims=True)
    yn = (y - mu) * jax.lax.rsqrt(var + 1e-5)
    out = yn * bias_ref[4:5, :] + bias_ref[5:6, :]
    out_ref[...] = out.reshape(bb, N, H)


def spatial_attention(x, mask, params, *, num_heads: int, batch_block=None):
    """x: (B, N, H) f32; mask: (N, N) f32 (1.0 where an edge exists)."""
    B, N, H = x.shape
    head_dim = H // num_heads
    hN = num_heads * N
    scale = 1.0 / math.sqrt(head_dim)

    # Grid strategy: v7x has 2 TensorCores -> split the batch into 2 "parallel"
    # grid steps (one fused super-step per core).  Single-TC chips (v5e/v6e):
    # collapse the whole batch into one grid step.  Either way, cap the number
    # of statically unrolled batches per step at 8 to bound vreg live ranges.
    if batch_block is None:
        try:
            kind = jax.devices()[0].device_kind.lower()
        except Exception:  # pragma: no cover - heuristic only
            kind = ""
        two_tc = ("v7" in kind) or ("7x" in kind)
        target = max(1, B // 2) if two_tc else B
        target = min(target, 8)
        batch_block = 1
        for d in range(target, 0, -1):
            if B % d == 0:
                batch_block = d
                break
    bb = batch_block
    assert B % bb == 0, "batch_block must divide the batch size"

    # ---------- wrapper-side glue (plain JAX, fused by XLA, traced once) ----------
    # Fused, pre-transposed QKV weight (nn.Linear stores W as (out, in)), with the
    # 1/sqrt(head_dim) scale folded into the Q block and each block padded to its
    # own 128-lane tile so the post-matmul column slices are tile-aligned.
    blk = ((H + 127) // 128) * 128
    zpad = jnp.zeros((H, blk - H), jnp.float32)
    w_qkv = jnp.concatenate(
        [params["wq"].T * scale, zpad,
         params["wk"].T, zpad,
         params["wv"].T, zpad], axis=1)                                  # (H, 3*blk)
    w_out = params["wo"].T                                               # (H, H)
    # Pack all (1, H) vectors into a single (8, H) tile: one DMA instead of six.
    bias_pack = jnp.concatenate(
        [params["bq"] * scale, params["bk"], params["bv"], params["bo"],
         params["gamma"], params["beta"], jnp.zeros((2, H), jnp.float32)], axis=0)
    # 0/1 head selector: sel[h*N + m, j] = 1 iff column j belongs to head h.
    head_of_row = jnp.repeat(jnp.arange(num_heads), N)                   # (hN,)
    head_of_col = jnp.repeat(jnp.arange(num_heads), head_dim)            # (H,)
    sel = (head_of_row[:, None] == head_of_col[None, :]).astype(jnp.float32)  # (hN, H)
    # Finite additive edge-mask bias (no -inf / NaN hazard), replicated per head.
    abias = jnp.tile((1.0 - mask) * jnp.float32(-1e30), (1, num_heads))  # (N, hN)

    kernel = functools.partial(spatial_attention_kernel, num_heads=num_heads)
    const2d = lambda shape: pl.BlockSpec(shape, lambda i: (0, 0))

    return pl.pallas_call(
        kernel,
        out_shape=jax.ShapeDtypeStruct((B, N, H), jnp.float32),
        grid_spec=pltpu.PrefetchScalarGridSpec(
            num_scalar_prefetch=0,
            grid=(B // bb,),
            in_specs=[
                pl.BlockSpec((bb, N, H), lambda i: (i, 0, 0)),  # x
                const2d((H, 3 * blk)),                          # fused QKV weight (padded)
                const2d((H, H)),                                # Wo.T
                const2d((8, H)),                                # packed biases/affine
                const2d((hN, H)),                               # head selector
                const2d((N, hN)),                               # additive mask bias
            ],
            out_specs=pl.BlockSpec((bb, N, H), lambda i: (i, 0, 0)),
        ),
        compiler_params=pltpu.CompilerParams(
            dimension_semantics=("parallel",)),
    )(x, w_qkv, w_out, bias_pack, sel, abias)


def reference_spatial_attention(x, mask, params, *, num_heads: int):
    """Pure-JAX reference mirroring the PyTorch forward (eval mode)."""
    B, N, H = x.shape
    d = H // num_heads

    def lin(v, w, b):
        return jnp.einsum("bnh,oh->bno", v, w) + b[0]

    q = lin(x, params["wq"], params["bq"]).reshape(B, N, num_heads, d).transpose(0, 2, 1, 3)
    k = lin(x, params["wk"], params["bk"]).reshape(B, N, num_heads, d).transpose(0, 2, 1, 3)
    v = lin(x, params["wv"], params["bv"]).reshape(B, N, num_heads, d).transpose(0, 2, 1, 3)

    scores = jnp.einsum("bhqd,bhkd->bhqk", q, k) / math.sqrt(d)
    scores = jnp.where(mask[None, None] > 0.5, scores, -jnp.inf)
    p = jax.nn.softmax(scores, axis=-1)
    att = jnp.einsum("bhqk,bhkd->bhqd", p, v).transpose(0, 2, 1, 3).reshape(B, N, H)
    out = jnp.einsum("bnh,oh->bno", att, params["wo"]) + params["bo"][0]
    y = x + out
    mu = jnp.mean(y, axis=-1, keepdims=True)
    var = jnp.mean((y - mu) ** 2, axis=-1, keepdims=True)
    return (y - mu) / jnp.sqrt(var + 1e-5) * params["gamma"][0] + params["beta"][0]


if __name__ == "__main__":
    # Small shapes consistent with the module: B=2, N=16 graph nodes,
    # hidden_dim=64, num_heads=8 -> head_dim=8.
    B, N, H, NUM_HEADS = 2, 16, 64, 8

    key = jax.random.PRNGKey(0)
    keys = jax.random.split(key, 12)

    x = jax.random.normal(keys[0], (B, N, H), dtype=jnp.float32)

    # Deterministic edge_index: self-loops + ring edges (every node has edges,
    # so no all-masked softmax rows).
    src = jnp.concatenate([jnp.arange(N), jnp.arange(N), jnp.arange(N)])
    dst = jnp.concatenate([jnp.arange(N), (jnp.arange(N) + 1) % N, (jnp.arange(N) - 1) % N])
    edge_index = jnp.stack([src, dst])  # (2, E)

    # Dense adjacency mask (glue, plain JAX), like torch mask[src, dst] = True.
    mask = jnp.zeros((N, N), dtype=jnp.float32).at[edge_index[0], edge_index[1]].set(1.0)

    # Deterministic parameter init (nn.Linear-style uniform bounds).
    bound = 1.0 / math.sqrt(H)
    u = lambda k, shape: jax.random.uniform(k, shape, jnp.float32, -bound, bound)
    params = {
        "wq": u(keys[1], (H, H)), "bq": u(keys[2], (1, H)),
        "wk": u(keys[3], (H, H)), "bk": u(keys[4], (1, H)),
        "wv": u(keys[5], (H, H)), "bv": u(keys[6], (1, H)),
        "wo": u(keys[7], (H, H)), "bo": u(keys[8], (1, H)),
        "gamma": jnp.ones((1, H), jnp.float32),
        "beta": jnp.zeros((1, H), jnp.float32),
    }

    out = spatial_attention(x, mask, params, num_heads=NUM_HEADS)
    out = jax.block_until_ready(out)

    ref = reference_spatial_attention(x, mask, params, num_heads=NUM_HEADS)
    assert out.shape == (B, N, H)
    assert jnp.allclose(out, ref, rtol=1e-3, atol=1e-3), "mismatch vs. reference"

    print("KERNEL_OK")
</pallas_src>

<mosaic_0001>
module attributes {stable_mosaic.version = 11 : i64} {
  func.func @spatial_attention_kernel(%arg0: i32, %arg1: memref<2x16x64xf32, #tpu.memory_space<vmem>>, %arg2: memref<64x384xf32, #tpu.memory_space<vmem>>, %arg3: memref<64x64xf32, #tpu.memory_space<vmem>>, %arg4: memref<8x64xf32, #tpu.memory_space<vmem>>, %arg5: memref<128x64xf32, #tpu.memory_space<vmem>>, %arg6: memref<16x128xf32, #tpu.memory_space<vmem>>, %arg7: memref<2x16x64xf32, #tpu.memory_space<vmem>>) attributes {dimension_semantics = [#tpu.dimension_semantics<parallel>], iteration_bounds = array<i64: 1>, scalar_prefetch = 0 : i64, scratch_operands = 0 : i64, tpu.core_type = #tpu.core_type<tc>, window_params = [{transform_indices = @transform_0, window_bounds = array<i64: 2, 16, 64>}, {pipeline_mode = #tpu.pipeline_mode<synchronous>, transform_indices = @transform_1, window_bounds = array<i64: 64, 384>}, {pipeline_mode = #tpu.pipeline_mode<synchronous>, transform_indices = @transform_2, window_bounds = array<i64: 64, 64>}, {pipeline_mode = #tpu.pipeline_mode<synchronous>, transform_indices = @transform_3, window_bounds = array<i64: 8, 64>}, {pipeline_mode = #tpu.pipeline_mode<synchronous>, transform_indices = @transform_4, window_bounds = array<i64: 128, 64>}, {pipeline_mode = #tpu.pipeline_mode<synchronous>, transform_indices = @transform_5, window_bounds = array<i64: 16, 128>}, {transform_indices = @transform_6, window_bounds = array<i64: 2, 16, 64>}]} {
    %c0 = arith.constant 0 : index
    %c0_0 = arith.constant 0 : index
    %c0_1 = arith.constant 0 : index
    %0 = vector.load %arg1[%c0, %c0_0, %c0_1] : memref<2x16x64xf32, #tpu.memory_space<vmem>>, vector<2x16x64xf32>
    %1 = vector.shape_cast %0 : vector<2x16x64xf32> to vector<32x64xf32>
    %c0_2 = arith.constant 0 : index
    %c0_3 = arith.constant 0 : index
    %2 = vector.load %arg2[%c0_2, %c0_3] : memref<64x384xf32, #tpu.memory_space<vmem>>, vector<64x384xf32>
    %cst = arith.constant dense<0.000000e+00> : vector<32x384xf32>
    %3 = tpu.matmul %1, %2, %cst {dimension_numbers = #tpu.dot_dimension_numbers<[1], [0], [0], [1], [0, 0, 1, 1], [], []>} : vector<32x64xf32>, vector<64x384xf32>, vector<32x384xf32> -> vector<32x384xf32>
    %4 = vector.extract_strided_slice %3 {offsets = [0, 0], sizes = [32, 64], strides = [1, 1]} : vector<32x384xf32> to vector<32x64xf32>
    %c0_4 = arith.constant 0 : index
    %c0_5 = arith.constant 0 : index
    %5 = vector.load %arg4[%c0_4, %c0_5] : memref<8x64xf32, #tpu.memory_space<vmem>>, vector<1x64xf32>
    %6 = vector.broadcast %5 : vector<1x64xf32> to vector<32x64xf32>
    %7 = arith.addf %4, %6 : vector<32x64xf32>
    %8 = vector.extract_strided_slice %3 {offsets = [0, 128], sizes = [32, 64], strides = [1, 1]} : vector<32x384xf32> to vector<32x64xf32>
    %c1 = arith.constant 1 : index
    %c0_6 = arith.constant 0 : index
    %9 = vector.load %arg4[%c1, %c0_6] : memref<8x64xf32, #tpu.memory_space<vmem>>, vector<1x64xf32>
    %10 = vector.broadcast %9 : vector<1x64xf32> to vector<32x64xf32>
    %11 = arith.addf %8, %10 : vector<32x64xf32>
    %12 = vector.extract_strided_slice %3 {offsets = [0, 256], sizes = [32, 64], strides = [1, 1]} : vector<32x384xf32> to vector<32x64xf32>
    %c2 = arith.constant 2 : index
    %c0_7 = arith.constant 0 : index
    %13 = vector.load %arg4[%c2, %c0_7] : memref<8x64xf32, #tpu.memory_space<vmem>>, vector<1x64xf32>
    %14 = vector.broadcast %13 : vector<1x64xf32> to vector<32x64xf32>
    %15 = arith.addf %12, %14 : vector<32x64xf32>
    %c0_8 = arith.constant 0 : index
    %c0_9 = arith.constant 0 : index
    %16 = vector.load %arg5[%c0_8, %c0_9] : memref<128x64xf32, #tpu.memory_space<vmem>>, vector<128x64xf32>
    %c0_10 = arith.constant 0 : index
    %c0_11 = arith.constant 0 : index
    %17 = vector.load %arg6[%c0_10, %c0_11] : memref<16x128xf32, #tpu.memory_space<vmem>>, vector<16x128xf32>
    %18 = vector.extract_strided_slice %7 {offsets = [0, 0], sizes = [16, 64], strides = [1, 1]} : vector<32x64xf32> to vector<16x64xf32>
    %19 = vector.extract_strided_slice %11 {offsets = [0, 0], sizes = [16, 64], strides = [1, 1]} : vector<32x64xf32> to vector<16x64xf32>
    %20 = vector.extract_strided_slice %15 {offsets = [0, 0], sizes = [16, 64], strides = [1, 1]} : vector<32x64xf32> to vector<16x64xf32>
    %21 = tpu.concatenate %19, %19, %19, %19, %19, %19, %19, %19 in 0 : vector<16x64xf32>, vector<16x64xf32>, vector<16x64xf32>, vector<16x64xf32>, vector<16x64xf32>, vector<16x64xf32>, vector<16x64xf32>, vector<16x64xf32> -> vector<128x64xf32>
    %22 = arith.mulf %21, %16 : vector<128x64xf32>
    %23 = tpu.concatenate %20, %20, %20, %20, %20, %20, %20, %20 in 0 : vector<16x64xf32>, vector<16x64xf32>, vector<16x64xf32>, vector<16x64xf32>, vector<16x64xf32>, vector<16x64xf32>, vector<16x64xf32>, vector<16x64xf32> -> vector<128x64xf32>
    %24 = arith.mulf %23, %16 : vector<128x64xf32>
    %cst_12 = arith.constant dense<0.000000e+00> : vector<16x128xf32>
    %25 = tpu.matmul %18, %22, %cst_12 {dimension_numbers = #tpu.dot_dimension_numbers<[1], [1], [0], [0], [0, 0, 1, 0], [], []>} : vector<16x64xf32>, vector<128x64xf32>, vector<16x128xf32> -> vector<16x128xf32>
    %26 = arith.addf %25, %17 : vector<16x128xf32>
    %cst_13 = arith.constant dense<0xFF800000> : vector<16xf32>
    %27 = vector.multi_reduction <maximumf>, %26, %cst_13 [1] : vector<16x128xf32> to vector<16xf32>
    %28 = vector.shape_cast %27 : vector<16xf32> to vector<16x1xf32>
    %29 = vector.broadcast %28 : vector<16x1xf32> to vector<16x128xf32>
    %30 = arith.subf %26, %29 : vector<16x128xf32>
    %31 = math.exp %30 : vector<16x128xf32>
    %cst_14 = arith.constant dense<0.000000e+00> : vector<16x64xf32>
    %32 = tpu.matmul %31, %24, %cst_14 {dimension_numbers = #tpu.dot_dimension_numbers<[1], [0], [0], [1], [0, 0, 1, 1], [], []>} : vector<16x128xf32>, vector<128x64xf32>, vector<16x64xf32> -> vector<16x64xf32>
    %cst_15 = arith.constant dense<0.000000e+00> : vector<16x64xf32>
    %33 = tpu.matmul %31, %16, %cst_15 {dimension_numbers = #tpu.dot_dimension_numbers<[1], [0], [0], [1], [0, 0, 1, 1], [], []>} : vector<16x128xf32>, vector<128x64xf32>, vector<16x64xf32> -> vector<16x64xf32>
    %cst_16 = arith.constant 1.000000e-30 : f32
    %34 = vector.broadcast %cst_16 : f32 to vector<16x64xf32>
    %35 = arith.maximumf %33, %34 : vector<16x64xf32>
    %36 = tpu.reciprocal %35 : vector<16x64xf32> -> vector<16x64xf32>
    %37 = arith.mulf %32, %36 : vector<16x64xf32>
    %38 = vector.extract_strided_slice %7 {offsets = [16, 0], sizes = [16, 64], strides = [1, 1]} : vector<32x64xf32> to vector<16x64xf32>
    %39 = vector.extract_strided_slice %11 {offsets = [16, 0], sizes = [16, 64], strides = [1, 1]} : vector<32x64xf32> to vector<16x64xf32>
    %40 = vector.extract_strided_slice %15 {offsets = [16, 0], sizes = [16, 64], strides = [1, 1]} : vector<32x64xf32> to vector<16x64xf32>
    %41 = tpu.concatenate %39, %39, %39, %39, %39, %39, %39, %39 in 0 : vector<16x64xf32>, vector<16x64xf32>, vector<16x64xf32>, vector<16x64xf32>, vector<16x64xf32>, vector<16x64xf32>, vector<16x64xf32>, vector<16x64xf32> -> vector<128x64xf32>
    %42 = arith.mulf %41, %16 : vector<128x64xf32>
    %43 = tpu.concatenate %40, %40, %40, %40, %40, %40, %40, %40 in 0 : vector<16x64xf32>, vector<16x64xf32>, vector<16x64xf32>, vector<16x64xf32>, vector<16x64xf32>, vector<16x64xf32>, vector<16x64xf32>, vector<16x64xf32> -> vector<128x64xf32>
    %44 = arith.mulf %43, %16 : vector<128x64xf32>
    %cst_17 = arith.constant dense<0.000000e+00> : vector<16x128xf32>
    %45 = tpu.matmul %38, %42, %cst_17 {dimension_numbers = #tpu.dot_dimension_numbers<[1], [1], [0], [0], [0, 0, 1, 0], [], []>} : vector<16x64xf32>, vector<128x64xf32>, vector<16x128xf32> -> vector<16x128xf32>
    %46 = arith.addf %45, %17 : vector<16x128xf32>
    %cst_18 = arith.constant dense<0xFF800000> : vector<16xf32>
    %47 = vector.multi_reduction <maximumf>, %46, %cst_18 [1] : vector<16x128xf32> to vector<16xf32>
    %48 = vector.shape_cast %47 : vector<16xf32> to vector<16x1xf32>
    %49 = vector.broadcast %48 : vector<16x1xf32> to vector<16x128xf32>
    %50 = arith.subf %46, %49 : vector<16x128xf32>
    %51 = math.exp %50 : vector<16x128xf32>
    %cst_19 = arith.constant dense<0.000000e+00> : vector<16x64xf32>
    %52 = tpu.matmul %51, %44, %cst_19 {dimension_numbers = #tpu.dot_dimension_numbers<[1], [0], [0], [1], [0, 0, 1, 1], [], []>} : vector<16x128xf32>, vector<128x64xf32>, vector<16x64xf32> -> vector<16x64xf32>
    %cst_20 = arith.constant dense<0.000000e+00> : vector<16x64xf32>
    %53 = tpu.matmul %51, %16, %cst_20 {dimension_numbers = #tpu.dot_dimension_numbers<[1], [0], [0], [1], [0, 0, 1, 1], [], []>} : vector<16x128xf32>, vector<128x64xf32>, vector<16x64xf32> -> vector<16x64xf32>
    %cst_21 = arith.constant 1.000000e-30 : f32
    %54 = vector.broadcast %cst_21 : f32 to vector<16x64xf32>
    %55 = arith.maximumf %53, %54 : vector<16x64xf32>
    %56 = tpu.reciprocal %55 : vector<16x64xf32> -> vector<16x64xf32>
    %57 = arith.mulf %52, %56 : vector<16x64xf32>
    %58 = tpu.concatenate %37, %57 in 0 : vector<16x64xf32>, vector<16x64xf32> -> vector<32x64xf32>
    %c0_22 = arith.constant 0 : index
    %c0_23 = arith.constant 0 : index
    %59 = vector.load %arg3[%c0_22, %c0_23] : memref<64x64xf32, #tpu.memory_space<vmem>>, vector<64x64xf32>
    %cst_24 = arith.constant dense<0.000000e+00> : vector<32x64xf32>
    %60 = tpu.matmul %58, %59, %cst_24 {dimension_numbers = #tpu.dot_dimension_numbers<[1], [0], [0], [1], [0, 0, 1, 1], [], []>} : vector<32x64xf32>, vector<64x64xf32>, vector<32x64xf32> -> vector<32x64xf32>
    %61 = arith.addf %1, %60 : vector<32x64xf32>
    %c3 = arith.constant 3 : index
    %c0_25 = arith.constant 0 : index
    %62 = vector.load %arg4[%c3, %c0_25] : memref<8x64xf32, #tpu.memory_space<vmem>>, vector<1x64xf32>
    %63 = vector.broadcast %62 : vector<1x64xf32> to vector<32x64xf32>
    %64 = arith.addf %61, %63 : vector<32x64xf32>
    %cst_26 = arith.constant dense<0.000000e+00> : vector<32xf32>
    %65 = vector.multi_reduction <add>, %64, %cst_26 [1] : vector<32x64xf32> to vector<32xf32>
    %66 = vector.shape_cast %65 : vector<32xf32> to vector<32x1xf32>
    %cst_27 = arith.constant 6.400000e+01 : f32
    %67 = vector.broadcast %cst_27 : f32 to vector<32x1xf32>
    %68 = arith.divf %66, %67 : vector<32x1xf32>
    %69 = vector.broadcast %68 : vector<32x1xf32> to vector<32x64xf32>
    %70 = arith.subf %64, %69 : vector<32x64xf32>
    %71 = vector.broadcast %68 : vector<32x1xf32> to vector<32x64xf32>
    %72 = arith.subf %64, %71 : vector<32x64xf32>
    %73 = arith.mulf %70, %72 : vector<32x64xf32>
    %cst_28 = arith.constant dense<0.000000e+00> : vector<32xf32>
    %74 = vector.multi_reduction <add>, %73, %cst_28 [1] : vector<32x64xf32> to vector<32xf32>
    %75 = vector.shape_cast %74 : vector<32xf32> to vector<32x1xf32>
    %cst_29 = arith.constant 6.400000e+01 : f32
    %76 = vector.broadcast %cst_29 : f32 to vector<32x1xf32>
    %77 = arith.divf %75, %76 : vector<32x1xf32>
    %78 = vector.broadcast %68 : vector<32x1xf32> to vector<32x64xf32>
    %79 = arith.subf %64, %78 : vector<32x64xf32>
    %cst_30 = arith.constant 9.99999974E-6 : f32
    %80 = vector.broadcast %cst_30 : f32 to vector<32x1xf32>
    %81 = arith.addf %77, %80 : vector<32x1xf32>
    %82 = math.rsqrt %81 : vector<32x1xf32>
    %83 = vector.broadcast %82 : vector<32x1xf32> to vector<32x64xf32>
    %84 = arith.mulf %79, %83 : vector<32x64xf32>
    %c4 = arith.constant 4 : index
    %c0_31 = arith.constant 0 : index
    %85 = vector.load %arg4[%c4, %c0_31] : memref<8x64xf32, #tpu.memory_space<vmem>>, vector<1x64xf32>
    %86 = vector.broadcast %85 : vector<1x64xf32> to vector<32x64xf32>
    %87 = arith.mulf %84, %86 : vector<32x64xf32>
    %c5 = arith.constant 5 : index
    %c0_32 = arith.constant 0 : index
    %88 = vector.load %arg4[%c5, %c0_32] : memref<8x64xf32, #tpu.memory_space<vmem>>, vector<1x64xf32>
    %89 = vector.broadcast %88 : vector<1x64xf32> to vector<32x64xf32>
    %90 = arith.addf %87, %89 : vector<32x64xf32>
    %91 = vector.shape_cast %90 : vector<32x64xf32> to vector<2x16x64xf32>
    %c0_33 = arith.constant 0 : index
    %c0_34 = arith.constant 0 : index
    %c0_35 = arith.constant 0 : index
    %92 = vector.load %arg7[%c0_33, %c0_34, %c0_35] : memref<2x16x64xf32, #tpu.memory_space<vmem>>, vector<2x16x64xf32>
    tpu.vector_store %arg7[%c0_33, %c0_34, %c0_35], %91 {strides = array<i32>} : memref<2x16x64xf32, #tpu.memory_space<vmem>>, vector<2x16x64xf32>,
    return
  }
  func.func @transform_0(%arg0: i32) -> (i32, i32, i32) {
    %c0_i32 = arith.constant 0 : i32
    %c0_i32_0 = arith.constant 0 : i32
    %c0_i32_1 = arith.constant 0 : i32
    return %arg0, %c0_i32, %c0_i32_0 : i32, i32, i32
  }
  func.func @transform_1(%arg0: i32) -> (i32, i32) {
    %c0_i32 = arith.constant 0 : i32
    %c0_i32_0 = arith.constant 0 : i32
    %c0_i32_1 = arith.constant 0 : i32
    return %c0_i32, %c0_i32_0 : i32, i32
  }
  func.func @transform_2(%arg0: i32) -> (i32, i32) {
    %c0_i32 = arith.constant 0 : i32
    %c0_i32_0 = arith.constant 0 : i32
    %c0_i32_1 = arith.constant 0 : i32
    return %c0_i32, %c0_i32_0 : i32, i32
  }
  func.func @transform_3(%arg0: i32) -> (i32, i32) {
    %c0_i32 = arith.constant 0 : i32
    %c0_i32_0 = arith.constant 0 : i32
    %c0_i32_1 = arith.constant 0 : i32
    return %c0_i32, %c0_i32_0 : i32, i32
  }
  func.func @transform_4(%arg0: i32) -> (i32, i32) {
    %c0_i32 = arith.constant 0 : i32
    %c0_i32_0 = arith.constant 0 : i32
    %c0_i32_1 = arith.constant 0 : i32
    return %c0_i32, %c0_i32_0 : i32, i32
  }
  func.func @transform_5(%arg0: i32) -> (i32, i32) {
    %c0_i32 = arith.constant 0 : i32
    %c0_i32_0 = arith.constant 0 : i32
    %c0_i32_1 = arith.constant 0 : i32
    return %c0_i32, %c0_i32_0 : i32, i32
  }
  func.func @transform_6(%arg0: i32) -> (i32, i32, i32) {
    %c0_i32 = arith.constant 0 : i32
    %c0_i32_0 = arith.constant 0 : i32
    %c0_i32_1 = arith.constant 0 : i32
    return %arg0, %c0_i32, %c0_i32_0 : i32, i32, i32
  }
}

</mosaic_0001>

<llo_original>
// kernel: tpu_custom_call.1
$region0: #{tpu_custom_call.1}
  #allocation0 [shape = 'u32[]', space=smem, size = 0x4, offset = 0x4, fixed_abs, tag = 'smem constant byte address 0x4 - core index']
  #allocation1 [shape = 'u32[144,128]{1,0:T(1,128)}', space=vmem, size = 0x12000, scoped, tag = 'internal scratch']
  %s0 = inlined_call_operand.hbm [shape: f32[2,16,64], index: 0, kind: input, shape index: {}]
  %s1 = inlined_call_operand.vmem [shape: f32[64,384], index: 1, kind: input, shape index: {}]
  %s2 = inlined_call_operand.hbm [shape: f32[64,64], index: 2, kind: input, shape index: {}]
  %s3 = inlined_call_operand.hbm [shape: f32[8,64], index: 3, kind: input, shape index: {}]
  %s4 = inlined_call_operand.vmem [shape: f32[128,64], index: 4, kind: input, shape index: {}]
  %s5 = inlined_call_operand.vmem [shape: f32[16,128], index: 5, kind: input, shape index: {}]
  %s6 = inlined_call_operand.hbm [shape: f32[2,16,64], index: 6, kind: output, shape index: {}]
  %s7 = sld [smem:[#allocation0]]
  $region46: #{tpu_custom_call.1} parent=0
    _
  %s9 = ssub.s32 1, %s7
  %s10 = scalar_select 0, %s9, %s7
  $region1: #{tpu_custom_call.1} parent=0
    #allocation2 [shape = 'u8[16384]{0}', space=vmem, size = 0x4000, scoped, tag = 'input window, operand 0, single buffered']
    #allocation3 [shape = 's32[1]{0}', space=sflag, size = 0x4, scoped, tag = 'scoped memory for tpu_custom_call.1']
    #allocation4 [shape = 's32[1]{0}', space=sflag, size = 0x4, scoped, tag = 'scoped memory for tpu_custom_call.1']
    #allocation5 [shape = 'u8[32768]{0}', space=vmem, size = 0x8000, scoped, tag = 'input window, operand 2, single buffered']
    #allocation6 [shape = 's32[1]{0}', space=sflag, size = 0x4, scoped, tag = 'scoped memory for tpu_custom_call.1']
    #allocation7 [shape = 'u8[4096]{0}', space=vmem, size = 0x1000, scoped, tag = 'input window, operand 3, single buffered']
    #allocation8 [shape = 'u8[16384]{0}', space=vmem, size = 0x4000, scoped, tag = 'output window, operand 0, single buffered']
    %11 = vsyncpa [#allocation3], 0
    %12 = vsyncpa [#allocation6], 0
    %13 = vsyncpa [#allocation4], 0
    // Predicated region
    $region2: #{tpu_custom_call.1} parent=1 // pred_check
      _
    $region3: #{tpu_custom_call.1} parent=1 // pred_check_branch
      %15 = sbr.rel (0) target = $region5
    $region4: #{tpu_custom_call.1} parent=1 // pred_region
      %s17 = ssub.s32 512, 512
      %18 = vsyncadd [#allocation3], %s17
      %s19 = sshll.u32 [#allocation2], 4
      %s20 = int_to_ptr.vmem [resolvable:$true] %s19
      %25 = dma.hbm_to_vmem [thread:$0]  %s0, 512, %s20, [#allocation3], 128, 128, 8
    $region5: #{tpu_custom_call.1} parent=1 // pred_fallthru
      _
    // Predicated region
    $region6: #{tpu_custom_call.1} parent=1 // pred_check
      _
    $region7: #{tpu_custom_call.1} parent=1 // pred_check_branch
      %27 = sbr.rel (0) target = $region9
    $region8: #{tpu_custom_call.1} parent=1 // pred_region
      _
    $region9: #{tpu_custom_call.1} parent=1 // pred_fallthru
      _
    // Predicated region
    $region10: #{tpu_custom_call.1} parent=1 // pred_check
      _
    $region11: #{tpu_custom_call.1} parent=1 // pred_check_branch
      %29 = sbr.rel (0) target = $region13
    $region12: #{tpu_custom_call.1} parent=1 // pred_region
      %s31 = ssub.s32 1024, 1024
      %32 = vsyncadd [#allocation6], %s31
      %s33 = sshll.u32 [#allocation5], 4
      %s34 = int_to_ptr.vmem [resolvable:$true] %s33
      %39 = dma.hbm_to_vmem [thread:$0]  %s2, 1024, %s34, [#allocation6], 128, 128, 8
    $region13: #{tpu_custom_call.1} parent=1 // pred_fallthru
      _
    // Predicated region
    $region14: #{tpu_custom_call.1} parent=1 // pred_check
      _
    $region15: #{tpu_custom_call.1} parent=1 // pred_check_branch
      %41 = sbr.rel (0) target = $region17
    $region16: #{tpu_custom_call.1} parent=1 // pred_region
      %s43 = ssub.s32 128, 128
      %44 = vsyncadd [#allocation6], %s43
      %s46 = sshll.u32 [#allocation7], 4
      %s47 = int_to_ptr.vmem [resolvable:$true] %s46
      %49 = dma.hbm_to_vmem [thread:$0]  %s3, 128, %s47, [#allocation6]
    $region17: #{tpu_custom_call.1} parent=1 // pred_fallthru
      _
    // Predicated region
    $region18: #{tpu_custom_call.1} parent=1 // pred_check
      _
    $region19: #{tpu_custom_call.1} parent=1 // pred_check_branch
      %51 = sbr.rel (0) target = $region21
    $region20: #{tpu_custom_call.1} parent=1 // pred_region
      _
    $region21: #{tpu_custom_call.1} parent=1 // pred_fallthru
      _
    // Predicated region
    $region22: #{tpu_custom_call.1} parent=1 // pred_check
      _
    $region23: #{tpu_custom_call.1} parent=1 // pred_check_branch
      %53 = sbr.rel (0) target = $region25
    $region24: #{tpu_custom_call.1} parent=1 // pred_region
      _
    $region25: #{tpu_custom_call.1} parent=1 // pred_fallthru
      _
    // Predicated region
    $region26: #{tpu_custom_call.1} parent=1 // pred_check
      _
    $region27: #{tpu_custom_call.1} parent=1 // pred_check_branch
      %55 = sbr.rel (0) target = $region29
    $region28: #{tpu_custom_call.1} parent=1 // pred_region
      %56 = dma.done [#allocation3], 512
    $region29: #{tpu_custom_call.1} parent=1 // pred_fallthru
      _
    // Predicated region
    $region30: #{tpu_custom_call.1} parent=1 // pred_check
      _
    $region31: #{tpu_custom_call.1} parent=1 // pred_check_branch
      %58 = sbr.rel (0) target = $region33
    $region32: #{tpu_custom_call.1} parent=1 // pred_region
      %59 = dma.done [#allocation6], 1024
    $region33: #{tpu_custom_call.1} parent=1 // pred_fallthru
      _
    // Predicated region
    $region34: #{tpu_custom_call.1} parent=1 // pred_check
      _
    $region35: #{tpu_custom_call.1} parent=1 // pred_check_branch
      %61 = sbr.rel (0) target = $region37
    $region36: #{tpu_custom_call.1} parent=1 // pred_region
      %62 = dma.done [#allocation6], 128
    $region37: #{tpu_custom_call.1} parent=1 // pred_fallthru
      _
    %v63 = vld [vmem:[#allocation2] sm:$0xff]
    %v64 = vld [vmem:[#allocation2 + $0x8] sm:$0xff]
    %v65 = vld [vmem:[#allocation2 + $0x10] sm:$0xff]
    %v66 = vld [vmem:[#allocation2 + $0x18] sm:$0xff]
    %v67 = vld [vmem:[%s1] sm:$0xff]
    %v68 = vld [vmem:[%s1 + $0x8] sm:$0xff]
    %v69 = vld [vmem:[%s1 + $0x10] sm:$0xff]
    %v70 = vld [vmem:[%s1 + $0x18] sm:$0xff]
    %v71 = vld [vmem:[%s1 + $0x20] sm:$0xff]
    %v72 = vld [vmem:[%s1 + $0x28] sm:$0xff]
    %v73 = vld [vmem:[%s1 + $0x30] sm:$0xff]
    %v74 = vld [vmem:[%s1 + $0x38] sm:$0xff]
    %v75 = vld [vmem:[%s1 + $0x40] sm:$0xff]
    %v76 = vld [vmem:[%s1 + $0x48] sm:$0xff]
    %v77 = vld [vmem:[%s1 + $0x50] sm:$0xff]
    %v78 = vld [vmem:[%s1 + $0x58] sm:$0xff]
    %v79 = vld [vmem:[%s1 + $0x60] sm:$0xff]
    %v80 = vld [vmem:[%s1 + $0x68] sm:$0xff]
    %v81 = vld [vmem:[%s1 + $0x70] sm:$0xff]
    %v82 = vld [vmem:[%s1 + $0x78] sm:$0xff]
    %v83 = vld [vmem:[%s1 + $0x80] sm:$0xff]
    %v84 = vld [vmem:[%s1 + $0x88] sm:$0xff]
    %v85 = vld [vmem:[%s1 + $0x90] sm:$0xff]
    %v86 = vld [vmem:[%s1 + $0x98] sm:$0xff]
    %v87 = vld [vmem:[%s1 + $0xa0] sm:$0xff]
    %v88 = vld [vmem:[%s1 + $0xa8] sm:$0xff]
    %v89 = vld [vmem:[%s1 + $0xb0] sm:$0xff]
    %v90 = vld [vmem:[%s1 + $0xb8] sm:$0xff]
    %vm91 = vcmask 523264
    %v93 = vsel %vm91, %v63, 0
    %v96 = vsel %vm91, %v64, 0
    %v99 = vsel %vm91, %v65, 0
    %v102 = vsel %vm91, %v66, 0
    %104 = vmatprep.subr.mxu0 %v68
    %105 = vmatpush1.msra.mxu0 %v67
    %106 = vmatprep.subr.mxu0 %v71
    %107 = vmatpush1.msra.mxu0 %v70
    %108 = vmatprep.subr.mxu0 %v74
    %109 = vmatpush1.msra.mxu0 %v73
    %110 = vmatprep.subr.mxu0 %v77
    %111 = vmatpush1.msra.mxu0 %v76
    %112 = vmatprep.subr.mxu0 %v80
    %113 = vmatpush1.msra.mxu0 %v79
    %114 = vmatprep.subr.mxu0 %v83
    %115 = vmatpush1.msra.mxu0 %v82
    %116 = vmatprep.subr.mxu0 %v86
    %117 = vmatpush1.msra.mxu0 %v85
    %118 = vmatprep.subr.mxu0 %v89
    %119 = vmatpush1.msra.mxu0 %v88
    %120 = vmatprep.subr.mxu0 0.0
    %121 = vmatpush1.msra.mxu0 0.0
    %122 = vmatprep.subr.mxu0 0.0
    %123 = vmatpush1.msra.mxu0 0.0
    %124 = vmatprep.subr.mxu0 0.0
    %125 = vmatpush1.msra.mxu0 0.0
    %126 = vmatprep.subr.mxu0 0.0
    %127 = vmatpush1.msra.mxu0 0.0
    %128 = vmatprep.subr.mxu0 0.0
    %129 = vmatpush1.msra.mxu0 0.0
    %130 = vmatprep.subr.mxu0 0.0
    %131 = vmatpush1.msra.mxu0 0.0
    %132 = vmatprep.subr.mxu0 0.0
    %133 = vmatpush1.msra.mxu0 0.0
    %134 = vmatprep.subr.mxu0 0.0
    %135 = vmatpush1.msra.mxu0 0.0
    %136 = vmatprep.subr.mxu0 0.0
    %137 = vmatpush1.msra.mxu0 0.0
    %138 = vmatprep.subr.mxu0 0.0
    %139 = vmatpush1.msra.mxu0 0.0
    %140 = vmatprep.subr.mxu0 0.0
    %141 = vmatpush1.msra.mxu0 0.0
    %142 = vmatprep.subr.mxu0 0.0
    %143 = vmatpush1.msra.mxu0 0.0
    %144 = vmatprep.subr.mxu0 0.0
    %145 = vmatpush1.msra.mxu0 0.0
    %146 = vmatprep.subr.mxu0 0.0
    %147 = vmatpush1.msra.mxu0 0.0
    %148 = vmatprep.subr.mxu0 0.0
    %149 = vmatpush1.msra.mxu0 0.0
    %150 = vmatprep.subr.mxu0 0.0
    %151 = vmatpush1.msra.mxu0 0.0
    %152 = vmatprep.subr.mxu0 0.0
    %153 = vmatpush1.msra.mxu0 0.0
    %154 = vmatprep.subr.mxu0 0.0
    %155 = vmatpush1.msra.mxu0 0.0
    %156 = vmatprep.subr.mxu0 0.0
    %157 = vmatpush1.msra.mxu0 0.0
    %158 = vmatprep.subr.mxu0 0.0
    %159 = vmatpush1.msra.mxu0 0.0
    %160 = vmatprep.subr.mxu0 0.0
    %161 = vmatpush1.msra.mxu0 0.0
    %162 = vmatprep.subr.mxu0 0.0
    %163 = vmatpush1.msra.mxu0 0.0
    %164 = vmatprep.subr.mxu0 0.0
    %165 = vmatpush1.msra.mxu0 0.0
    %166 = vmatprep.subr.mxu0 0.0
    %167 = vmatpush1.msra.mxu0 0.0
    %168 = vmatprep.mubr.f32.mxu0 0.0
    %169 = vmatmul.mubr.f32.gmra.mrb[0].mxu0 %v93
    %v170 = vpop.f32.mrb[0].mxu0
    %v171 = vadd.f32 0.0, %v170
    %v172 = vpop.f32.mrb[0].mxu0
    %v173 = vadd.f32 0.0, %v172
    %174 = vmatprep.mubr.f32.mxu0 0.0
    %175 = vmatmul.mubr.f32.gmra.mrb[0].mxu0 %v96
    %v176 = vpop.f32.mrb[0].mxu0
    %v177 = vadd.f32 0.0, %v176
    %v178 = vpop.f32.mrb[0].mxu0
    %v179 = vadd.f32 0.0, %v178
    %180 = vmatprep.mubr.f32.mxu0 0.0
    %181 = vmatmul.mubr.f32.gmra.mrb[0].mxu0 %v99
    %v182 = vpop.f32.mrb[0].mxu0
    %v183 = vadd.f32 0.0, %v182
    %v184 = vpop.f32.mrb[0].mxu0
    %v185 = vadd.f32 0.0, %v184
    %186 = vmatprep.mubr.f32.mxu0 0.0
    %187 = vmatmul.mubr.f32.gmra.mrb[0].mxu0 %v102
    %v188 = vpop.f32.mrb[0].mxu0
    %v189 = vadd.f32 0.0, %v188
    %v190 = vpop.f32.mrb[0].mxu0
    %v191 = vadd.f32 0.0, %v190
    %192 = vdwg.mxu0
    %193 = vmatprep.subr.mxu0 0.0
    %194 = vmatpush1.msra.mxu0 %v69
    %195 = vmatprep.subr.mxu0 0.0
    %196 = vmatpush1.msra.mxu0 %v72
    %197 = vmatprep.subr.mxu0 0.0
    %198 = vmatpush1.msra.mxu0 %v75
    %199 = vmatprep.subr.mxu0 0.0
    %200 = vmatpush1.msra.mxu0 %v78
    %201 = vmatprep.subr.mxu0 0.0
    %202 = vmatpush1.msra.mxu0 %v81
    %203 = vmatprep.subr.mxu0 0.0
    %204 = vmatpush1.msra.mxu0 %v84
    %205 = vmatprep.subr.mxu0 0.0
    %206 = vmatpush1.msra.mxu0 %v87
    %207 = vmatprep.subr.mxu0 0.0
    %208 = vmatpush1.msra.mxu0 %v90
    %209 = vmatprep.subr.mxu0 0.0
    %210 = vmatpush1.msra.mxu0 0.0
    %211 = vmatprep.subr.mxu0 0.0
    %212 = vmatpush1.msra.mxu0 0.0
    %213 = vmatprep.subr.mxu0 0.0
    %214 = vmatpush1.msra.mxu0 0.0
    %215 = vmatprep.subr.mxu0 0.0
    %216 = vmatpush1.msra.mxu0 0.0
    %217 = vmatprep.subr.mxu0 0.0
    %218 = vmatpush1.msra.mxu0 0.0
    %219 = vmatprep.subr.mxu0 0.0
    %220 = vmatpush1.msra.mxu0 0.0
    %221 = vmatprep.subr.mxu0 0.0
    %222 = vmatpush1.msra.mxu0 0.0
    %223 = vmatprep.subr.mxu0 0.0
    %224 = vmatpush1.msra.mxu0 0.0
    %225 = vmatprep.subr.mxu0 0.0
    %226 = vmatpush1.msra.mxu0 0.0
    %227 = vmatprep.subr.mxu0 0.0
    %228 = vmatpush1.msra.mxu0 0.0
    %229 = vmatprep.subr.mxu0 0.0
    %230 = vmatpush1.msra.mxu0 0.0
    %231 = vmatprep.subr.mxu0 0.0
    %232 = vmatpush1.msra.mxu0 0.0
    %233 = vmatprep.subr.mxu0 0.0
    %234 = vmatpush1.msra.mxu0 0.0
    %235 = vmatprep.subr.mxu0 0.0
    %236 = vmatpush1.msra.mxu0 0.0
    %237 = vmatprep.subr.mxu0 0.0
    %238 = vmatpush1.msra.mxu0 0.0
    %239 = vmatprep.subr.mxu0 0.0
    %240 = vmatpush1.msra.mxu0 0.0
    %241 = vmatprep.subr.mxu0 0.0
    %242 = vmatpush1.msra.mxu0 0.0
    %243 = vmatprep.subr.mxu0 0.0
    %244 = vmatpush1.msra.mxu0 0.0
    %245 = vmatprep.subr.mxu0 0.0
    %246 = vmatpush1.msra.mxu0 0.0
    %247 = vmatprep.subr.mxu0 0.0
    %248 = vmatpush1.msra.mxu0 0.0
    %249 = vmatprep.subr.mxu0 0.0
    %250 = vmatpush1.msra.mxu0 0.0
    %251 = vmatprep.subr.mxu0 0.0
    %252 = vmatpush1.msra.mxu0 0.0
    %253 = vmatprep.subr.mxu0 0.0
    %254 = vmatpush1.msra.mxu0 0.0
    %255 = vmatprep.subr.mxu0 0.0
    %256 = vmatpush1.msra.mxu0 0.0
    %257 = vmatprep.mubr.f32.mxu0 0.0
    %258 = vmatmul.mubr.f32.gmra.mrb[0].mxu0 %v93
    %v259 = vpop.f32.mrb[0].mxu0
    %v260 = vadd.f32 0.0, %v259
    %v261 = vpop.f32.mrb[0].mxu0
    %262 = vmatprep.mubr.f32.mxu0 0.0
    %263 = vmatmul.mubr.f32.gmra.mrb[0].mxu0 %v96
    %v264 = vpop.f32.mrb[0].mxu0
    %v265 = vadd.f32 0.0, %v264
    %v266 = vpop.f32.mrb[0].mxu0
    %267 = vmatprep.mubr.f32.mxu0 0.0
    %268 = vmatmul.mubr.f32.gmra.mrb[0].mxu0 %v99
    %v269 = vpop.f32.mrb[0].mxu0
    %v270 = vadd.f32 0.0, %v269
    %v271 = vpop.f32.mrb[0].mxu0
    %272 = vmatprep.mubr.f32.mxu0 0.0
    %273 = vmatmul.mubr.f32.gmra.mrb[0].mxu0 %v102
    %v274 = vpop.f32.mrb[0].mxu0
    %v275 = vadd.f32 0.0, %v274
    %v276 = vpop.f32.mrb[0].mxu0
    %277 = vdwg.mxu0
    %v278 = vld [vmem:[#allocation7] sm:$0x1]
    %v279 = vlaneseq
    %v280 = vshrl.u32 %v279, 7
    %v281 = vsub.s32 0, %v280
    %v282 = vrot.slane %v278, %v281
    %v283 = vadd.f32 %v171, %v282
    %v284 = vadd.f32 %v177, %v282
    %v285 = vadd.f32 %v183, %v282
    %v286 = vadd.f32 %v189, %v282
    %v287 = vld [vmem:[#allocation7 + $0x1] sm:$0x1]
    %v288 = vlaneseq
    %v289 = vshrl.u32 %v288, 7
    %v290 = vsub.s32 0, %v289
    %v291 = vrot.slane %v287, %v290
    %v292 = vadd.f32 %v173, %v291
    %v293 = vadd.f32 %v179, %v291
    %v294 = vadd.f32 %v185, %v291
    %v295 = vadd.f32 %v191, %v291
    %v296 = vld [vmem:[#allocation7 + $0x2] sm:$0x1]
    %v297 = vlaneseq
    %v298 = vshrl.u32 %v297, 7
    %v299 = vsub.s32 0, %v298
    %v300 = vrot.slane %v296, %v299
    %v301 = vadd.f32 %v260, %v300
    %v302 = vadd.f32 %v265, %v300
    %v303 = vadd.f32 %v270, %v300
    %v304 = vadd.f32 %v275, %v300
    %v305 = vld [vmem:[%s4] sm:$0xff]
    %v306 = vld [vmem:[%s4 + $0x8] sm:$0xff]
    %v307 = vld [vmem:[%s4 + $0x10] sm:$0xff]
    %v308 = vld [vmem:[%s4 + $0x18] sm:$0xff]
    %v309 = vld [vmem:[%s4 + $0x20] sm:$0xff]
    %v310 = vld [vmem:[%s4 + $0x28] sm:$0xff]
    %v311 = vld [vmem:[%s4 + $0x30] sm:$0xff]
    %v312 = vld [vmem:[%s4 + $0x38] sm:$0xff]
    %v313 = vld [vmem:[%s4 + $0x40] sm:$0xff]
    %v314 = vld [vmem:[%s4 + $0x48] sm:$0xff]
    %v315 = vld [vmem:[%s4 + $0x50] sm:$0xff]
    %v316 = vld [vmem:[%s4 + $0x58] sm:$0xff]
    %v317 = vld [vmem:[%s4 + $0x60] sm:$0xff]
    %v318 = vld [vmem:[%s4 + $0x68] sm:$0xff]
    %v319 = vld [vmem:[%s4 + $0x70] sm:$0xff]
    %v320 = vld [vmem:[%s4 + $0x78] sm:$0xff]
    %v321 = vld [vmem:[%s5] sm:$0xff]
    %v322 = vld [vmem:[%s5 + $0x8] sm:$0xff]
    %v323 = vmul.f32 %v292, %v305
    %v324 = vmul.f32 %v293, %v306
    %v325 = vmul.f32 %v292, %v307
    %v326 = vmul.f32 %v293, %v308
    %v327 = vmul.f32 %v292, %v309
    %v328 = vmul.f32 %v293, %v310
    %v329 = vmul.f32 %v292, %v311
    %v330 = vmul.f32 %v293, %v312
    %v331 = vmul.f32 %v292, %v313
    %v332 = vmul.f32 %v293, %v314
    %v333 = vmul.f32 %v292, %v315
    %v334 = vmul.f32 %v293, %v316
    %v335 = vmul.f32 %v292, %v317
    %v336 = vmul.f32 %v293, %v318
    %v337 = vmul.f32 %v292, %v319
    %v338 = vmul.f32 %v293, %v320
    %v339 = vmul.f32 %v301, %v305
    %v340 = vmul.f32 %v302, %v306
    %v341 = vmul.f32 %v301, %v307
    %v342 = vmul.f32 %v302, %v308
    %v343 = vmul.f32 %v301, %v309
    %v344 = vmul.f32 %v302, %v310
    %v345 = vmul.f32 %v301, %v311
    %v346 = vmul.f32 %v302, %v312
    %v347 = vmul.f32 %v301, %v313
    %v348 = vmul.f32 %v302, %v314
    %v349 = vmul.f32 %v301, %v315
    %v350 = vmul.f32 %v302, %v316
    %v351 = vmul.f32 %v301, %v317
    %v352 = vmul.f32 %v302, %v318
    %v353 = vmul.f32 %v301, %v319
    %v354 = vmul.f32 %v302, %v320
    %v356 = vsel %vm91, %v283, 0
    %v359 = vsel %vm91, %v284, 0
    %v362 = vsel %vm91, %v323, 0
    %v365 = vsel %vm91, %v324, 0
    %v368 = vsel %vm91, %v325, 0
    %v371 = vsel %vm91, %v326, 0
    %v374 = vsel %vm91, %v327, 0
    %v377 = vsel %vm91, %v328, 0
    %v380 = vsel %vm91, %v329, 0
    %v383 = vsel %vm91, %v330, 0
    %v386 = vsel %vm91, %v331, 0
    %v389 = vsel %vm91, %v332, 0
    %v392 = vsel %vm91, %v333, 0
    %v395 = vsel %vm91, %v334, 0
    %v398 = vsel %vm91, %v335, 0
    %v401 = vsel %vm91, %v336, 0
    %v404 = vsel %vm91, %v337, 0
    %v407 = vsel %vm91, %v338, 0
    %409 = vmatprep.subr.mxu0 0.0
    %410 = vmatpush1.xpose.msra.mxu0 %v362
    %411 = vmatprep.subr.mxu0 0.0
    %412 = vmatpush1.xpose.msra.mxu0 %v365
    %413 = vmatprep.subr.mxu0 0.0
    %414 = vmatpush1.xpose.msra.mxu0 %v368
    %415 = vmatprep.subr.mxu0 0.0
    %416 = vmatpush1.xpose.msra.mxu0 %v371
    %417 = vmatprep.subr.mxu0 0.0
    %418 = vmatpush1.xpose.msra.mxu0 %v374
    %419 = vmatprep.subr.mxu0 0.0
    %420 = vmatpush1.xpose.msra.mxu0 %v377
    %421 = vmatprep.subr.mxu0 0.0
    %422 = vmatpush1.xpose.msra.mxu0 %v380
    %423 = vmatprep.subr.mxu0 0.0
    %424 = vmatpush1.xpose.msra.mxu0 %v383
    %425 = vmatprep.subr.mxu0 0.0
    %426 = vmatpush1.xpose.msra.mxu0 %v386
    %427 = vmatprep.subr.mxu0 0.0
    %428 = vmatpush1.xpose.msra.mxu0 %v389
    %429 = vmatprep.subr.mxu0 0.0
    %430 = vmatpush1.xpose.msra.mxu0 %v392
    %431 = vmatprep.subr.mxu0 0.0
    %432 = vmatpush1.xpose.msra.mxu0 %v395
    %433 = vmatprep.subr.mxu0 0.0
    %434 = vmatpush1.xpose.msra.mxu0 %v398
    %435 = vmatprep.subr.mxu0 0.0
    %436 = vmatpush1.xpose.msra.mxu0 %v401
    %437 = vmatprep.subr.mxu0 0.0
    %438 = vmatpush1.xpose.msra.mxu0 %v404
    %439 = vmatprep.subr.mxu0 0.0
    %440 = vmatpush1.xpose.msra.mxu0 %v407
    %441 = vmatprep.subr.mxu0 0.0
    %442 = vmatpush1.xpose.msra.mxu0 0.0
    %443 = vmatprep.subr.mxu0 0.0
    %444 = vmatpush1.xpose.msra.mxu0 0.0
    %445 = vmatprep.subr.mxu0 0.0
    %446 = vmatpush1.xpose.msra.mxu0 0.0
    %447 = vmatprep.subr.mxu0 0.0
    %448 = vmatpush1.xpose.msra.mxu0 0.0
    %449 = vmatprep.subr.mxu0 0.0
    %450 = vmatpush1.xpose.msra.mxu0 0.0
    %451 = vmatprep.subr.mxu0 0.0
    %452 = vmatpush1.xpose.msra.mxu0 0.0
    %453 = vmatprep.subr.mxu0 0.0
    %454 = vmatpush1.xpose.msra.mxu0 0.0
    %455 = vmatprep.subr.mxu0 0.0
    %456 = vmatpush1.xpose.msra.mxu0 0.0
    %457 = vmatprep.subr.mxu0 0.0
    %458 = vmatpush1.xpose.msra.mxu0 0.0
    %459 = vmatprep.subr.mxu0 0.0
    %460 = vmatpush1.xpose.msra.mxu0 0.0
    %461 = vmatprep.subr.mxu0 0.0
    %462 = vmatpush1.xpose.msra.mxu0 0.0
    %463 = vmatprep.subr.mxu0 0.0
    %464 = vmatpush1.xpose.msra.mxu0 0.0
    %465 = vmatprep.subr.mxu0 0.0
    %466 = vmatpush1.xpose.msra.mxu0 0.0
    %467 = vmatprep.subr.mxu0 0.0
    %468 = vmatpush1.xpose.msra.mxu0 0.0
    %469 = vmatprep.subr.mxu0 0.0
    %470 = vmatpush1.xpose.msra.mxu0 0.0
    %471 = vmatprep.subr.mxu0 0.0
    %472 = vmatpush1.xpose.msra.mxu0 0.0
    %473 = vmatprep.mubr.f32.mxu0 0.0
    %474 = vmatmul.mubr.f32.gmra.mrb[0].mxu0 %v356
    %v475 = vpop.f32.mrb[0].mxu0
    %v476 = vadd.f32 %v321, %v475
    %v477 = vpop.f32.mrb[0].mxu0
    %478 = vmatprep.mubr.f32.mxu0 0.0
    %479 = vmatmul.mubr.f32.gmra.mrb[0].mxu0 %v359
    %v480 = vpop.f32.mrb[0].mxu0
    %v481 = vadd.f32 %v322, %v480
    %v482 = vpop.f32.mrb[0].mxu0
    %483 = vdwg.mxu0
    %484 = vmax.xlane.f32.xlu0 %v476
    %v485 = vpop.xlane.xlu0 %484
    %486 = vmax.xlane.f32.xlu0 %v481
    %v487 = vpop.xlane.xlu0 %486
    %v488 = vsub.f32 %v476, %v485
    %v489 = vsub.f32 %v481, %v487
    %v490 = vmul.f32 %v488, 1.442695
    %v491 = vpow.pop %v490
    %v492 = vmul.f32 %v489, 1.442695
    %v493 = vpow.pop %v492
    %494 = vmatprep.subr.mxu0 0.0
    %495 = vmatpush1.msra.mxu0 %v339
    %496 = vmatprep.subr.mxu0 0.0
    %497 = vmatpush1.msra.mxu0 %v340
    %498 = vmatprep.subr.mxu0 0.0
    %499 = vmatpush1.msra.mxu0 %v341
    %500 = vmatprep.subr.mxu0 0.0
    %501 = vmatpush1.msra.mxu0 %v342
    %502 = vmatprep.subr.mxu0 0.0
    %503 = vmatpush1.msra.mxu0 %v343
    %504 = vmatprep.subr.mxu0 0.0
    %505 = vmatpush1.msra.mxu0 %v344
    %506 = vmatprep.subr.mxu0 0.0
    %507 = vmatpush1.msra.mxu0 %v345
    %508 = vmatprep.subr.mxu0 0.0
    %509 = vmatpush1.msra.mxu0 %v346
    %510 = vmatprep.subr.mxu0 0.0
    %511 = vmatpush1.msra.mxu0 %v347
    %512 = vmatprep.subr.mxu0 0.0
    %513 = vmatpush1.msra.mxu0 %v348
    %514 = vmatprep.subr.mxu0 0.0
    %515 = vmatpush1.msra.mxu0 %v349
    %516 = vmatprep.subr.mxu0 0.0
    %517 = vmatpush1.msra.mxu0 %v350
    %518 = vmatprep.subr.mxu0 0.0
    %519 = vmatpush1.msra.mxu0 %v351
    %520 = vmatprep.subr.mxu0 0.0
    %521 = vmatpush1.msra.mxu0 %v352
    %522 = vmatprep.subr.mxu0 0.0
    %523 = vmatpush1.msra.mxu0 %v353
    %524 = vmatprep.subr.mxu0 0.0
    %525 = vmatpush1.msra.mxu0 %v354
    %526 = vmatprep.subr.mxu0 0.0
    %527 = vmatpush1.msra.mxu0 0.0
    %528 = vmatprep.subr.mxu0 0.0
    %529 = vmatpush1.msra.mxu0 0.0
    %530 = vmatprep.subr.mxu0 0.0
    %531 = vmatpush1.msra.mxu0 0.0
    %532 = vmatprep.subr.mxu0 0.0
    %533 = vmatpush1.msra.mxu0 0.0
    %534 = vmatprep.subr.mxu0 0.0
    %535 = vmatpush1.msra.mxu0 0.0
    %536 = vmatprep.subr.mxu0 0.0
    %537 = vmatpush1.msra.mxu0 0.0
    %538 = vmatprep.subr.mxu0 0.0
    %539 = vmatpush1.msra.mxu0 0.0
    %540 = vmatprep.subr.mxu0 0.0
    %541 = vmatpush1.msra.mxu0 0.0
    %542 = vmatprep.subr.mxu0 0.0
    %543 = vmatpush1.msra.mxu0 0.0
    %544 = vmatprep.subr.mxu0 0.0
    %545 = vmatpush1.msra.mxu0 0.0
    %546 = vmatprep.subr.mxu0 0.0
    %547 = vmatpush1.msra.mxu0 0.0
    %548 = vmatprep.subr.mxu0 0.0
    %549 = vmatpush1.msra.mxu0 0.0
    %550 = vmatprep.subr.mxu0 0.0
    %551 = vmatpush1.msra.mxu0 0.0
    %552 = vmatprep.subr.mxu0 0.0
    %553 = vmatpush1.msra.mxu0 0.0
    %554 = vmatprep.subr.mxu0 0.0
    %555 = vmatpush1.msra.mxu0 0.0
    %556 = vmatprep.subr.mxu0 0.0
    %557 = vmatpush1.msra.mxu0 0.0
    %558 = vmatprep.mubr.f32.mxu0 0.0
    %559 = vmatmul.mubr.f32.gmra.mrb[0].mxu0 %v491
    %v560 = vpop.f32.mrb[0].mxu0
    %v561 = vadd.f32 0.0, %v560
    %v562 = vpop.f32.mrb[0].mxu0
    %563 = vmatprep.mubr.f32.mxu0 0.0
    %564 = vmatmul.mubr.f32.gmra.mrb[0].mxu0 %v493
    %v565 = vpop.f32.mrb[0].mxu0
    %v566 = vadd.f32 0.0, %v565
    %v567 = vpop.f32.mrb[0].mxu0
    %568 = vdwg.mxu0
    %569 = vmatprep.subr.mxu0 0.0
    %570 = vmatpush1.msra.mxu0 %v305
    %571 = vmatprep.subr.mxu0 0.0
    %572 = vmatpush1.msra.mxu0 %v306
    %573 = vmatprep.subr.mxu0 0.0
    %574 = vmatpush1.msra.mxu0 %v307
    %575 = vmatprep.subr.mxu0 0.0
    %576 = vmatpush1.msra.mxu0 %v308
    %577 = vmatprep.subr.mxu0 0.0
    %578 = vmatpush1.msra.mxu0 %v309
    %579 = vmatprep.subr.mxu0 0.0
    %580 = vmatpush1.msra.mxu0 %v310
    %581 = vmatprep.subr.mxu0 0.0
    %582 = vmatpush1.msra.mxu0 %v311
    %583 = vmatprep.subr.mxu0 0.0
    %584 = vmatpush1.msra.mxu0 %v312
    %585 = vmatprep.subr.mxu0 0.0
    %586 = vmatpush1.msra.mxu0 %v313
    %587 = vmatprep.subr.mxu0 0.0
    %588 = vmatpush1.msra.mxu0 %v314
    %589 = vmatprep.subr.mxu0 0.0
    %590 = vmatpush1.msra.mxu0 %v315
    %591 = vmatprep.subr.mxu0 0.0
    %592 = vmatpush1.msra.mxu0 %v316
    %593 = vmatprep.subr.mxu0 0.0
    %594 = vmatpush1.msra.mxu0 %v317
    %595 = vmatprep.subr.mxu0 0.0
    %596 = vmatpush1.msra.mxu0 %v318
    %597 = vmatprep.subr.mxu0 0.0
    %598 = vmatpush1.msra.mxu0 %v319
    %599 = vmatprep.subr.mxu0 0.0
    %600 = vmatpush1.msra.mxu0 %v320
    %601 = vmatprep.subr.mxu0 0.0
    %602 = vmatpush1.msra.mxu0 0.0
    %603 = vmatprep.subr.mxu0 0.0
    %604 = vmatpush1.msra.mxu0 0.0
    %605 = vmatprep.subr.mxu0 0.0
    %606 = vmatpush1.msra.mxu0 0.0
    %607 = vmatprep.subr.mxu0 0.0
    %608 = vmatpush1.msra.mxu0 0.0
    %609 = vmatprep.subr.mxu0 0.0
    %610 = vmatpush1.msra.mxu0 0.0
    %611 = vmatprep.subr.mxu0 0.0
    %612 = vmatpush1.msra.mxu0 0.0
    %613 = vmatprep.subr.mxu0 0.0
    %614 = vmatpush1.msra.mxu0 0.0
    %615 = vmatprep.subr.mxu0 0.0
    %616 = vmatpush1.msra.mxu0 0.0
    %617 = vmatprep.subr.mxu0 0.0
    %618 = vmatpush1.msra.mxu0 0.0
    %619 = vmatprep.subr.mxu0 0.0
    %620 = vmatpush1.msra.mxu0 0.0
    %621 = vmatprep.subr.mxu0 0.0
    %622 = vmatpush1.msra.mxu0 0.0
    %623 = vmatprep.subr.mxu0 0.0
    %624 = vmatpush1.msra.mxu0 0.0
    %625 = vmatprep.subr.mxu0 0.0
    %626 = vmatpush1.msra.mxu0 0.0
    %627 = vmatprep.subr.mxu0 0.0
    %628 = vmatpush1.msra.mxu0 0.0
    %629 = vmatprep.subr.mxu0 0.0
    %630 = vmatpush1.msra.mxu0 0.0
    %631 = vmatprep.subr.mxu0 0.0
    %632 = vmatpush1.msra.mxu0 0.0
    %633 = vmatprep.mubr.f32.mxu0 0.0
    %634 = vmatmul.mubr.f32.gmra.mrb[0].mxu0 %v491
    %v635 = vpop.f32.mrb[0].mxu0
    %v636 = vadd.f32 0.0, %v635
    %v637 = vpop.f32.mrb[0].mxu0
    %638 = vmatprep.mubr.f32.mxu0 0.0
    %639 = vmatmul.mubr.f32.gmra.mrb[0].mxu0 %v493
    %v640 = vpop.f32.mrb[0].mxu0
    %v641 = vadd.f32 0.0, %v640
    %v642 = vpop.f32.mrb[0].mxu0
    %643 = vdwg.mxu0
    %v644 = vmax.f32 %v636, 1e-30
    %v645 = vmax.f32 %v641, 1e-30
    %v646 = vrcp.pop %v644
    %v647 = vrcp.pop %v645
    %v648 = vmul.f32 %v561, %v646
    %v649 = vmul.f32 %v566, %v647
    %v650 = vmul.f32 %v294, %v305
    %v651 = vmul.f32 %v295, %v306
    %v652 = vmul.f32 %v294, %v307
    %v653 = vmul.f32 %v295, %v308
    %v654 = vmul.f32 %v294, %v309
    %v655 = vmul.f32 %v295, %v310
    %v656 = vmul.f32 %v294, %v311
    %v657 = vmul.f32 %v295, %v312
    %v658 = vmul.f32 %v294, %v313
    %v659 = vmul.f32 %v295, %v314
    %v660 = vmul.f32 %v294, %v315
    %v661 = vmul.f32 %v295, %v316
    %v662 = vmul.f32 %v294, %v317
    %v663 = vmul.f32 %v295, %v318
    %v664 = vmul.f32 %v294, %v319
    %v665 = vmul.f32 %v295, %v320
    %v666 = vmul.f32 %v303, %v305
    %v667 = vmul.f32 %v304, %v306
    %v668 = vmul.f32 %v303, %v307
    %v669 = vmul.f32 %v304, %v308
    %v670 = vmul.f32 %v303, %v309
    %v671 = vmul.f32 %v304, %v310
    %v672 = vmul.f32 %v303, %v311
    %v673 = vmul.f32 %v304, %v312
    %v674 = vmul.f32 %v303, %v313
    %v675 = vmul.f32 %v304, %v314
    %v676 = vmul.f32 %v303, %v315
    %v677 = vmul.f32 %v304, %v316
    %v678 = vmul.f32 %v303, %v317
    %v679 = vmul.f32 %v304, %v318
    %v680 = vmul.f32 %v303, %v319
    %v681 = vmul.f32 %v304, %v320
    %v683 = vsel %vm91, %v285, 0
    %v686 = vsel %vm91, %v286, 0
    %v689 = vsel %vm91, %v650, 0
    %v692 = vsel %vm91, %v651, 0
    %v695 = vsel %vm91, %v652, 0
    %v698 = vsel %vm91, %v653, 0
    %v701 = vsel %vm91, %v654, 0
    %v704 = vsel %vm91, %v655, 0
    %v707 = vsel %vm91, %v656, 0
    %v710 = vsel %vm91, %v657, 0
    %v713 = vsel %vm91, %v658, 0
    %v716 = vsel %vm91, %v659, 0
    %v719 = vsel %vm91, %v660, 0
    %v722 = vsel %vm91, %v661, 0
    %v725 = vsel %vm91, %v662, 0
    %v728 = vsel %vm91, %v663, 0
    %v731 = vsel %vm91, %v664, 0
    %v734 = vsel %vm91, %v665, 0
    %736 = vmatprep.subr.mxu0 0.0
    %737 = vmatpush1.xpose.msra.mxu0 %v689
    %738 = vmatprep.subr.mxu0 0.0
    %739 = vmatpush1.xpose.msra.mxu0 %v692
    %740 = vmatprep.subr.mxu0 0.0
    %741 = vmatpush1.xpose.msra.mxu0 %v695
    %742 = vmatprep.subr.mxu0 0.0
    %743 = vmatpush1.xpose.msra.mxu0 %v698
    %744 = vmatprep.subr.mxu0 0.0
    %745 = vmatpush1.xpose.msra.mxu0 %v701
    %746 = vmatprep.subr.mxu0 0.0
    %747 = vmatpush1.xpose.msra.mxu0 %v704
    %748 = vmatprep.subr.mxu0 0.0
    %749 = vmatpush1.xpose.msra.mxu0 %v707
    %750 = vmatprep.subr.mxu0 0.0
    %751 = vmatpush1.xpose.msra.mxu0 %v710
    %752 = vmatprep.subr.mxu0 0.0
    %753 = vmatpush1.xpose.msra.mxu0 %v713
    %754 = vmatprep.subr.mxu0 0.0
    %755 = vmatpush1.xpose.msra.mxu0 %v716
    %756 = vmatprep.subr.mxu0 0.0
    %757 = vmatpush1.xpose.msra.mxu0 %v719
    %758 = vmatprep.subr.mxu0 0.0
    %759 = vmatpush1.xpose.msra.mxu0 %v722
    %760 = vmatprep.subr.mxu0 0.0
    %761 = vmatpush1.xpose.msra.mxu0 %v725
    %762 = vmatprep.subr.mxu0 0.0
    %763 = vmatpush1.xpose.msra.mxu0 %v728
    %764 = vmatprep.subr.mxu0 0.0
    %765 = vmatpush1.xpose.msra.mxu0 %v731
    %766 = vmatprep.subr.mxu0 0.0
    %767 = vmatpush1.xpose.msra.mxu0 %v734
    %768 = vmatprep.subr.mxu0 0.0
    %769 = vmatpush1.xpose.msra.mxu0 0.0
    %770 = vmatprep.subr.mxu0 0.0
    %771 = vmatpush1.xpose.msra.mxu0 0.0
    %772 = vmatprep.subr.mxu0 0.0
    %773 = vmatpush1.xpose.msra.mxu0 0.0
    %774 = vmatprep.subr.mxu0 0.0
    %775 = vmatpush1.xpose.msra.mxu0 0.0
    %776 = vmatprep.subr.mxu0 0.0
    %777 = vmatpush1.xpose.msra.mxu0 0.0
    %778 = vmatprep.subr.mxu0 0.0
    %779 = vmatpush1.xpose.msra.mxu0 0.0
    %780 = vmatprep.subr.mxu0 0.0
    %781 = vmatpush1.xpose.msra.mxu0 0.0
    %782 = vmatprep.subr.mxu0 0.0
    %783 = vmatpush1.xpose.msra.mxu0 0.0
    %784 = vmatprep.subr.mxu0 0.0
    %785 = vmatpush1.xpose.msra.mxu0 0.0
    %786 = vmatprep.subr.mxu0 0.0
    %787 = vmatpush1.xpose.msra.mxu0 0.0
    %788 = vmatprep.subr.mxu0 0.0
    %789 = vmatpush1.xpose.msra.mxu0 0.0
    %790 = vmatprep.subr.mxu0 0.0
    %791 = vmatpush1.xpose.msra.mxu0 0.0
    %792 = vmatprep.subr.mxu0 0.0
    %793 = vmatpush1.xpose.msra.mxu0 0.0
    %794 = vmatprep.subr.mxu0 0.0
    %795 = vmatpush1.xpose.msra.mxu0 0.0
    %796 = vmatprep.subr.mxu0 0.0
    %797 = vmatpush1.xpose.msra.mxu0 0.0
    %798 = vmatprep.subr.mxu0 0.0
    %799 = vmatpush1.xpose.msra.mxu0 0.0
    %800 = vmatprep.mubr.f32.mxu0 0.0
    %801 = vmatmul.mubr.f32.gmra.mrb[0].mxu0 %v683
    %v802 = vpop.f32.mrb[0].mxu0
    %v803 = vadd.f32 %v321, %v802
    %v804 = vpop.f32.mrb[0].mxu0
    %805 = vmatprep.mubr.f32.mxu0 0.0
    %806 = vmatmul.mubr.f32.gmra.mrb[0].mxu0 %v686
    %v807 = vpop.f32.mrb[0].mxu0
    %v808 = vadd.f32 %v322, %v807
    %v809 = vpop.f32.mrb[0].mxu0
    %810 = vdwg.mxu0
    %811 = vmax.xlane.f32.xlu0 %v803
    %v812 = vpop.xlane.xlu0 %811
    %813 = vmax.xlane.f32.xlu0 %v808
    %v814 = vpop.xlane.xlu0 %813
    %v815 = vsub.f32 %v803, %v812
    %v816 = vsub.f32 %v808, %v814
    %v817 = vmul.f32 %v815, 1.442695
    %v818 = vpow.pop %v817
    %v819 = vmul.f32 %v816, 1.442695
    %v820 = vpow.pop %v819
    %821 = vmatprep.subr.mxu0 0.0
    %822 = vmatpush1.msra.mxu0 %v666
    %823 = vmatprep.subr.mxu0 0.0
    %824 = vmatpush1.msra.mxu0 %v667
    %825 = vmatprep.subr.mxu0 0.0
    %826 = vmatpush1.msra.mxu0 %v668
    %827 = vmatprep.subr.mxu0 0.0
    %828 = vmatpush1.msra.mxu0 %v669
    %829 = vmatprep.subr.mxu0 0.0
    %830 = vmatpush1.msra.mxu0 %v670
    %831 = vmatprep.subr.mxu0 0.0
    %832 = vmatpush1.msra.mxu0 %v671
    %833 = vmatprep.subr.mxu0 0.0
    %834 = vmatpush1.msra.mxu0 %v672
    %835 = vmatprep.subr.mxu0 0.0
    %836 = vmatpush1.msra.mxu0 %v673
    %837 = vmatprep.subr.mxu0 0.0
    %838 = vmatpush1.msra.mxu0 %v674
    %839 = vmatprep.subr.mxu0 0.0
    %840 = vmatpush1.msra.mxu0 %v675
    %841 = vmatprep.subr.mxu0 0.0
    %842 = vmatpush1.msra.mxu0 %v676
    %843 = vmatprep.subr.mxu0 0.0
    %844 = vmatpush1.msra.mxu0 %v677
    %845 = vmatprep.subr.mxu0 0.0
    %846 = vmatpush1.msra.mxu0 %v678
    %847 = vmatprep.subr.mxu0 0.0
    %848 = vmatpush1.msra.mxu0 %v679
    %849 = vmatprep.subr.mxu0 0.0
    %850 = vmatpush1.msra.mxu0 %v680
    %851 = vmatprep.subr.mxu0 0.0
    %852 = vmatpush1.msra.mxu0 %v681
    %853 = vmatprep.subr.mxu0 0.0
    %854 = vmatpush1.msra.mxu0 0.0
    %855 = vmatprep.subr.mxu0 0.0
    %856 = vmatpush1.msra.mxu0 0.0
    %857 = vmatprep.subr.mxu0 0.0
    %858 = vmatpush1.msra.mxu0 0.0
    %859 = vmatprep.subr.mxu0 0.0
    %860 = vmatpush1.msra.mxu0 0.0
    %861 = vmatprep.subr.mxu0 0.0
    %862 = vmatpush1.msra.mxu0 0.0
    %863 = vmatprep.subr.mxu0 0.0
    %864 = vmatpush1.msra.mxu0 0.0
    %865 = vmatprep.subr.mxu0 0.0
    %866 = vmatpush1.msra.mxu0 0.0
    %867 = vmatprep.subr.mxu0 0.0
    %868 = vmatpush1.msra.mxu0 0.0
    %869 = vmatprep.subr.mxu0 0.0
    %870 = vmatpush1.msra.mxu0 0.0
    %871 = vmatprep.subr.mxu0 0.0
    %872 = vmatpush1.msra.mxu0 0.0
    %873 = vmatprep.subr.mxu0 0.0
    %874 = vmatpush1.msra.mxu0 0.0
    %875 = vmatprep.subr.mxu0 0.0
    %876 = vmatpush1.msra.mxu0 0.0
    %877 = vmatprep.subr.mxu0 0.0
    %878 = vmatpush1.msra.mxu0 0.0
    %879 = vmatprep.subr.mxu0 0.0
    %880 = vmatpush1.msra.mxu0 0.0
    %881 = vmatprep.subr.mxu0 0.0
    %882 = vmatpush1.msra.mxu0 0.0
    %883 = vmatprep.subr.mxu0 0.0
    %884 = vmatpush1.msra.mxu0 0.0
    %885 = vmatprep.mubr.f32.mxu0 0.0
    %886 = vmatmul.mubr.f32.gmra.mrb[0].mxu0 %v818
    %v887 = vpop.f32.mrb[0].mxu0
    %v888 = vadd.f32 0.0, %v887
    %v889 = vpop.f32.mrb[0].mxu0
    %890 = vmatprep.mubr.f32.mxu0 0.0
    %891 = vmatmul.mubr.f32.gmra.mrb[0].mxu0 %v820
    %v892 = vpop.f32.mrb[0].mxu0
    %v893 = vadd.f32 0.0, %v892
    %v894 = vpop.f32.mrb[0].mxu0
    %895 = vdwg.mxu0
    %896 = vmatprep.subr.mxu0 0.0
    %897 = vmatpush1.msra.mxu0 %v305
    %898 = vmatprep.subr.mxu0 0.0
    %899 = vmatpush1.msra.mxu0 %v306
    %900 = vmatprep.subr.mxu0 0.0
    %901 = vmatpush1.msra.mxu0 %v307
    %902 = vmatprep.subr.mxu0 0.0
    %903 = vmatpush1.msra.mxu0 %v308
    %904 = vmatprep.subr.mxu0 0.0
    %905 = vmatpush1.msra.mxu0 %v309
    %906 = vmatprep.subr.mxu0 0.0
    %907 = vmatpush1.msra.mxu0 %v310
    %908 = vmatprep.subr.mxu0 0.0
    %909 = vmatpush1.msra.mxu0 %v311
    %910 = vmatprep.subr.mxu0 0.0
    %911 = vmatpush1.msra.mxu0 %v312
    %912 = vmatprep.subr.mxu0 0.0
    %913 = vmatpush1.msra.mxu0 %v313
    %914 = vmatprep.subr.mxu0 0.0
    %915 = vmatpush1.msra.mxu0 %v314
    %916 = vmatprep.subr.mxu0 0.0
    %917 = vmatpush1.msra.mxu0 %v315
    %918 = vmatprep.subr.mxu0 0.0
    %919 = vmatpush1.msra.mxu0 %v316
    %920 = vmatprep.subr.mxu0 0.0
    %921 = vmatpush1.msra.mxu0 %v317
    %922 = vmatprep.subr.mxu0 0.0
    %923 = vmatpush1.msra.mxu0 %v318
    %924 = vmatprep.subr.mxu0 0.0
    %925 = vmatpush1.msra.mxu0 %v319
    %926 = vmatprep.subr.mxu0 0.0
    %927 = vmatpush1.msra.mxu0 %v320
    %928 = vmatprep.subr.mxu0 0.0
    %929 = vmatpush1.msra.mxu0 0.0
    %930 = vmatprep.subr.mxu0 0.0
    %931 = vmatpush1.msra.mxu0 0.0
    %932 = vmatprep.subr.mxu0 0.0
    %933 = vmatpush1.msra.mxu0 0.0
    %934 = vmatprep.subr.mxu0 0.0
    %935 = vmatpush1.msra.mxu0 0.0
    %936 = vmatprep.subr.mxu0 0.0
    %937 = vmatpush1.msra.mxu0 0.0
    %938 = vmatprep.subr.mxu0 0.0
    %939 = vmatpush1.msra.mxu0 0.0
    %940 = vmatprep.subr.mxu0 0.0
    %941 = vmatpush1.msra.mxu0 0.0
    %942 = vmatprep.subr.mxu0 0.0
    %943 = vmatpush1.msra.mxu0 0.0
    %944 = vmatprep.subr.mxu0 0.0
    %945 = vmatpush1.msra.mxu0 0.0
    %946 = vmatprep.subr.mxu0 0.0
    %947 = vmatpush1.msra.mxu0 0.0
    %948 = vmatprep.subr.mxu0 0.0
    %949 = vmatpush1.msra.mxu0 0.0
    %950 = vmatprep.subr.mxu0 0.0
    %951 = vmatpush1.msra.mxu0 0.0
    %952 = vmatprep.subr.mxu0 0.0
    %953 = vmatpush1.msra.mxu0 0.0
    %954 = vmatprep.subr.mxu0 0.0
    %955 = vmatpush1.msra.mxu0 0.0
    %956 = vmatprep.subr.mxu0 0.0
    %957 = vmatpush1.msra.mxu0 0.0
    %958 = vmatprep.subr.mxu0 0.0
    %959 = vmatpush1.msra.mxu0 0.0
    %960 = vmatprep.mubr.f32.mxu0 0.0
    %961 = vmatmul.mubr.f32.gmra.mrb[0].mxu0 %v818
    %v962 = vpop.f32.mrb[0].mxu0
    %v963 = vadd.f32 0.0, %v962
    %v964 = vpop.f32.mrb[0].mxu0
    %965 = vmatprep.mubr.f32.mxu0 0.0
    %966 = vmatmul.mubr.f32.gmra.mrb[0].mxu0 %v820
    %v967 = vpop.f32.mrb[0].mxu0
    %v968 = vadd.f32 0.0, %v967
    %v969 = vpop.f32.mrb[0].mxu0
    %970 = vdwg.mxu0
    %v971 = vmax.f32 %v963, 1e-30
    %v972 = vmax.f32 %v968, 1e-30
    %v973 = vrcp.pop %v971
    %v974 = vrcp.pop %v972
    %v975 = vmul.f32 %v888, %v973
    %v976 = vmul.f32 %v893, %v974
    %v977 = vld [vmem:[#allocation5] sm:$0xff]
    %v978 = vld [vmem:[#allocation5 + $0x8] sm:$0xff]
    %v979 = vld [vmem:[#allocation5 + $0x10] sm:$0xff]
    %v980 = vld [vmem:[#allocation5 + $0x18] sm:$0xff]
    %v981 = vld [vmem:[#allocation5 + $0x20] sm:$0xff]
    %v982 = vld [vmem:[#allocation5 + $0x28] sm:$0xff]
    %v983 = vld [vmem:[#allocation5 + $0x30] sm:$0xff]
    %v984 = vld [vmem:[#allocation5 + $0x38] sm:$0xff]
    %v986 = vsel %vm91, %v648, 0
    %v989 = vsel %vm91, %v649, 0
    %v992 = vsel %vm91, %v975, 0
    %v995 = vsel %vm91, %v976, 0
    %997 = vmatprep.subr.mxu0 0.0
    %998 = vmatpush1.msra.mxu0 %v977
    %999 = vmatprep.subr.mxu0 0.0
    %1000 = vmatpush1.msra.mxu0 %v978
    %1001 = vmatprep.subr.mxu0 0.0
    %1002 = vmatpush1.msra.mxu0 %v979
    %1003 = vmatprep.subr.mxu0 0.0
    %1004 = vmatpush1.msra.mxu0 %v980
    %1005 = vmatprep.subr.mxu0 0.0
    %1006 = vmatpush1.msra.mxu0 %v981
    %1007 = vmatprep.subr.mxu0 0.0
    %1008 = vmatpush1.msra.mxu0 %v982
    %1009 = vmatprep.subr.mxu0 0.0
    %1010 = vmatpush1.msra.mxu0 %v983
    %1011 = vmatprep.subr.mxu0 0.0
    %1012 = vmatpush1.msra.mxu0 %v984
    %1013 = vmatprep.subr.mxu0 0.0
    %1014 = vmatpush1.msra.mxu0 0.0
    %1015 = vmatprep.subr.mxu0 0.0
    %1016 = vmatpush1.msra.mxu0 0.0
    %1017 = vmatprep.subr.mxu0 0.0
    %1018 = vmatpush1.msra.mxu0 0.0
    %1019 = vmatprep.subr.mxu0 0.0
    %1020 = vmatpush1.msra.mxu0 0.0
    %1021 = vmatprep.subr.mxu0 0.0
    %1022 = vmatpush1.msra.mxu0 0.0
    %1023 = vmatprep.subr.mxu0 0.0
    %1024 = vmatpush1.msra.mxu0 0.0
    %1025 = vmatprep.subr.mxu0 0.0
    %1026 = vmatpush1.msra.mxu0 0.0
    %1027 = vmatprep.subr.mxu0 0.0
    %1028 = vmatpush1.msra.mxu0 0.0
    %1029 = vmatprep.subr.mxu0 0.0
    %1030 = vmatpush1.msra.mxu0 0.0
    %1031 = vmatprep.subr.mxu0 0.0
    %1032 = vmatpush1.msra.mxu0 0.0
    %1033 = vmatprep.subr.mxu0 0.0
    %1034 = vmatpush1.msra.mxu0 0.0
    %1035 = vmatprep.subr.mxu0 0.0
    %1036 = vmatpush1.msra.mxu0 0.0
    %1037 = vmatprep.subr.mxu0 0.0
    %1038 = vmatpush1.msra.mxu0 0.0
    %1039 = vmatprep.subr.mxu0 0.0
    %1040 = vmatpush1.msra.mxu0 0.0
    %1041 = vmatprep.subr.mxu0 0.0
    %1042 = vmatpush1.msra.mxu0 0.0
    %1043 = vmatprep.subr.mxu0 0.0
    %1044 = vmatpush1.msra.mxu0 0.0
    %1045 = vmatprep.subr.mxu0 0.0
    %1046 = vmatpush1.msra.mxu0 0.0
    %1047 = vmatprep.subr.mxu0 0.0
    %1048 = vmatpush1.msra.mxu0 0.0
    %1049 = vmatprep.subr.mxu0 0.0
    %1050 = vmatpush1.msra.mxu0 0.0
    %1051 = vmatprep.subr.mxu0 0.0
    %1052 = vmatpush1.msra.mxu0 0.0
    %1053 = vmatprep.subr.mxu0 0.0
    %1054 = vmatpush1.msra.mxu0 0.0
    %1055 = vmatprep.subr.mxu0 0.0
    %1056 = vmatpush1.msra.mxu0 0.0
    %1057 = vmatprep.subr.mxu0 0.0
    %1058 = vmatpush1.msra.mxu0 0.0
    %1059 = vmatprep.subr.mxu0 0.0
    %1060 = vmatpush1.msra.mxu0 0.0
    %1061 = vmatprep.mubr.f32.mxu0 0.0
    %1062 = vmatmul.mubr.f32.gmra.mrb[0].mxu0 %v986
    %v1063 = vpop.f32.mrb[0].mxu0
    %v1064 = vadd.f32 0.0, %v1063
    %v1065 = vpop.f32.mrb[0].mxu0
    %1066 = vmatprep.mubr.f32.mxu0 0.0
    %1067 = vmatmul.mubr.f32.gmra.mrb[0].mxu0 %v989
    %v1068 = vpop.f32.mrb[0].mxu0
    %v1069 = vadd.f32 0.0, %v1068
    %v1070 = vpop.f32.mrb[0].mxu0
    %1071 = vmatprep.mubr.f32.mxu0 0.0
    %1072 = vmatmul.mubr.f32.gmra.mrb[0].mxu0 %v992
    %v1073 = vpop.f32.mrb[0].mxu0
    %v1074 = vadd.f32 0.0, %v1073
    %v1075 = vpop.f32.mrb[0].mxu0
    %1076 = vmatprep.mubr.f32.mxu0 0.0
    %1077 = vmatmul.mubr.f32.gmra.mrb[0].mxu0 %v995
    %v1078 = vpop.f32.mrb[0].mxu0
    %v1079 = vadd.f32 0.0, %v1078
    %v1080 = vpop.f32.mrb[0].mxu0
    %1081 = vdwg.mxu0
    %v1082 = vadd.f32 %v63, %v1064
    %v1083 = vadd.f32 %v64, %v1069
    %v1084 = vadd.f32 %v65, %v1074
    %v1085 = vadd.f32 %v66, %v1079
    %v1086 = vld [vmem:[#allocation7 + $0x3] sm:$0x1]
    %v1087 = vlaneseq
    %v1088 = vshrl.u32 %v1087, 7
    %v1089 = vsub.s32 0, %v1088
    %v1090 = vrot.slane %v1086, %v1089
    %v1091 = vadd.f32 %v1082, %v1090
    %v1092 = vadd.f32 %v1083, %v1090
    %v1093 = vadd.f32 %v1084, %v1090
    %v1094 = vadd.f32 %v1085, %v1090
    %v1095 = vsel %vm91, %v1091, 0.0
    %1096 = vadd.xlane.f32.xlu0 %v1095
    %v1097 = vpop.xlane.xlu0 %1096
    %v1098 = vsel %vm91, %v1092, 0.0
    %1099 = vadd.xlane.f32.xlu0 %v1098
    %v1100 = vpop.xlane.xlu0 %1099
    %v1101 = vsel %vm91, %v1093, 0.0
    %1102 = vadd.xlane.f32.xlu0 %v1101
    %v1103 = vpop.xlane.xlu0 %1102
    %v1104 = vsel %vm91, %v1094, 0.0
    %1105 = vadd.xlane.f32.xlu0 %v1104
    %v1106 = vpop.xlane.xlu0 %1105
    %v1107 = vrcp.pop 64.0
    %v1108 = vmul.f32 %v1097, %v1107
    %v1109 = vmul.f32 %v1100, %v1107
    %v1110 = vmul.f32 %v1103, %v1107
    %v1111 = vmul.f32 %v1106, %v1107
    %v1112 = vsub.f32 %v1091, %v1108
    %v1113 = vsub.f32 %v1092, %v1109
    %v1114 = vsub.f32 %v1093, %v1110
    %v1115 = vsub.f32 %v1094, %v1111
    %v1116 = vmul.f32 %v1112, %v1112
    %v1117 = vmul.f32 %v1113, %v1113
    %v1118 = vmul.f32 %v1114, %v1114
    %v1119 = vmul.f32 %v1115, %v1115
    %v1120 = vsel %vm91, %v1116, 0.0
    %1121 = vadd.xlane.f32.xlu0 %v1120
    %v1122 = vpop.xlane.xlu0 %1121
    %v1123 = vsel %vm91, %v1117, 0.0
    %1124 = vadd.xlane.f32.xlu0 %v1123
    %v1125 = vpop.xlane.xlu0 %1124
    %v1126 = vsel %vm91, %v1118, 0.0
    %1127 = vadd.xlane.f32.xlu0 %v1126
    %v1128 = vpop.xlane.xlu0 %1127
    %v1129 = vsel %vm91, %v1119, 0.0
    %1130 = vadd.xlane.f32.xlu0 %v1129
    %v1131 = vpop.xlane.xlu0 %1130
    %v1132 = vmul.f32 %v1122, %v1107
    %v1133 = vmul.f32 %v1125, %v1107
    %v1134 = vmul.f32 %v1128, %v1107
    %v1135 = vmul.f32 %v1131, %v1107
    %v1136 = vadd.f32 %v1132, 1e-05
    %v1137 = vadd.f32 %v1133, 1e-05
    %v1138 = vadd.f32 %v1134, 1e-05
    %v1139 = vadd.f32 %v1135, 1e-05
    %v1140 = vrsqrt.pop %v1136
    %v1141 = vrsqrt.pop %v1137
    %v1142 = vrsqrt.pop %v1138
    %v1143 = vrsqrt.pop %v1139
    %v1144 = vmul.f32 %v1112, %v1140
    %v1145 = vmul.f32 %v1113, %v1141
    %v1146 = vmul.f32 %v1114, %v1142
    %v1147 = vmul.f32 %v1115, %v1143
    %v1148 = vld [vmem:[#allocation7 + $0x4] sm:$0x1]
    %v1149 = vlaneseq
    %v1150 = vshrl.u32 %v1149, 7
    %v1151 = vsub.s32 0, %v1150
    %v1152 = vrot.slane %v1148, %v1151
    %v1153 = vmul.f32 %v1144, %v1152
    %v1154 = vmul.f32 %v1145, %v1152
    %v1155 = vmul.f32 %v1146, %v1152
    %v1156 = vmul.f32 %v1147, %v1152
    %v1157 = vld [vmem:[#allocation7 + $0x5] sm:$0x1]
    %v1158 = vlaneseq
    %v1159 = vshrl.u32 %v1158, 7
    %v1160 = vsub.s32 0, %v1159
    %v1161 = vrot.slane %v1157, %v1160
    %v1162 = vadd.f32 %v1153, %v1161
    %v1163 = vadd.f32 %v1154, %v1161
    %v1164 = vadd.f32 %v1155, %v1161
    %v1165 = vadd.f32 %v1156, %v1161
    %1166 = vst.msk [vmem:[#allocation8] sm:$0xff] %vm91, %v1162
    %1167 = vst.msk [vmem:[#allocation8 + $0x8] sm:$0xff] %vm91, %v1163
    %1168 = vst.msk [vmem:[#allocation8 + $0x10] sm:$0xff] %vm91, %v1164
    %1169 = vst.msk [vmem:[#allocation8 + $0x18] sm:$0xff] %vm91, %v1165
    // Predicated region
    $region38: #{tpu_custom_call.1} parent=1 // pred_check
      _
    $region39: #{tpu_custom_call.1} parent=1 // pred_check_branch
      %1171 = sbr.rel (0) target = $region41
    $region40: #{tpu_custom_call.1} parent=1 // pred_region
      %s1173 = ssub.s32 512, 512
      %1174 = vsyncadd [#allocation4], %s1173
      %s1175 = sshll.u32 [#allocation8], 4
      %s1176 = int_to_ptr.vmem [resolvable:$true] %s1175
      %1181 = dma.vmem_to_hbm [thread:$0]  %s1176, 512, %s6, [#allocation4], 128, 128, 8
    $region41: #{tpu_custom_call.1} parent=1 // pred_fallthru
      _
    // Predicated region
    $region42: #{tpu_custom_call.1} parent=1 // pred_check
      _
    $region43: #{tpu_custom_call.1} parent=1 // pred_check_branch
      %1183 = sbr.rel (0) target = $region45
    $region44: #{tpu_custom_call.1} parent=1 // pred_region
      %1184 = dma.done [#allocation4], 512
    $region45: #{tpu_custom_call.1} parent=1 // pred_fallthru
      _
    %1185 = vsyncpa [#allocation3], 1
    %1186 = vsyncpa [#allocation6], 1
    %1187 = vsyncpa [#allocation4], 1

</llo_original>
